<compile_context>
chip_gen: v7x
topology: tpu7x:2x2x1
jax: 0.10.0
libtpu: 0.0.40
codegen_flags: <defaults>
</compile_context>

<pallas_src>
import functools

import jax
import jax.numpy as jnp
from jax.experimental import pallas as pl
from jax.experimental.pallas import tpu as pltpu

_LANES = 128
_WIDTH_CANDIDATES = (1024, 512, 256, 128)   # full-width lane counts (f32 rows)
_PALLAS_MIN_BYTES = 4 << 20                 # below this, fused jnp.full wins

_CORE_PARALLEL = getattr(pltpu, "CORE_PARALLEL", None)


def _device_kind() -> str:
    try:
        return jax.devices()[0].device_kind.lower()
    except Exception:
        return ""


def _is_v7x() -> bool:
    kind = _device_kind()
    return ("v7" in kind) or kind.startswith("tpu7")


def _target_block_bytes() -> int:
    # 8 MiB blocks on v7x (3.2 TB/s HBM; 2 x 8 MiB fits the 32 MiB default
    # scoped VMEM); 4 MiB elsewhere (fits v5e's 16 MiB default when
    # double-buffered, ~90% of the store roofline on v6e).
    return (8 << 20) if _is_v7x() else (4 << 20)


def _round_up(v: int, m: int) -> int:
    return ((v + m - 1) // m) * m


# ----------------------------------------------------------------------------
# Pallas kernel: splat the SMEM scalar `best` into one (block_rows, width)
# full-width (contiguous-in-HBM) output block.
# ----------------------------------------------------------------------------
def _leaf_fill_kernel(best_ref, out_ref):
    # best_ref: SMEM (1,) float32 -- the leaf's constant predictor.
    # out_ref:  VMEM (block_rows, width) float32.
    out_ref[...] = jnp.full(out_ref.shape, best_ref[0], dtype=out_ref.dtype)


@functools.partial(jax.jit, static_argnums=(0, 1))
def _leaf_fill_jit(n: int, use_core_parallel: bool, best: jax.Array) -> jax.Array:
    # Lay the logical (n,) output out as an (rows, width) f32 slab, width a
    # multiple of 128 chosen so rows * width == n_pad (== n when n % 128 == 0).
    # Blocks cover the full width -> each block is one contiguous HBM write.
    n_pad = _round_up(n, _LANES)
    width = next(w for w in _WIDTH_CANDIDATES if n_pad % w == 0)
    rows = n_pad // width
    row_bytes = width * 4
    block_rows = max(1, _target_block_bytes() // row_bytes)
    if block_rows >= rows:
        block_rows = rows                               # single full-extent block
    else:
        block_rows = max(8, (block_rows // 8) * 8)      # sublane-aligned
    grid = (pl.cdiv(rows, block_rows),)

    if use_core_parallel and _CORE_PARALLEL is not None:
        semantics = (_CORE_PARALLEL,)                   # split rows across v7x TCs
    else:
        semantics = ("parallel",)

    best_arr = jnp.asarray(best, dtype=jnp.float32).reshape((1,))
    out2d = pl.pallas_call(
        _leaf_fill_kernel,
        out_shape=jax.ShapeDtypeStruct((rows, width), jnp.float32),
        grid=grid,
        in_specs=[pl.BlockSpec(memory_space=pltpu.SMEM)],
        out_specs=pl.BlockSpec((block_rows, width), lambda i: (i, 0)),
        compiler_params=pltpu.CompilerParams(dimension_semantics=semantics),
        cost_estimate=pl.CostEstimate(
            flops=0, transcendentals=0, bytes_accessed=4 * rows * width + 4),
    )(best_arr)

    out = out2d.reshape((n_pad,))   # row-major reshape: free bitcast
    if n_pad != n:                  # only the forced/ragged path pays this slice
        out = out[:n]
    return out


def _leaf_forward_pallas(n: int, best) -> jax.Array:
    best = jnp.asarray(best, dtype=jnp.float32)
    if not _is_v7x():
        return _leaf_fill_jit(n, False, best)
    try:
        return _leaf_fill_jit(n, True, best)
    except Exception:
        # Conservative fallback if CORE_PARALLEL is rejected on this build.
        return _leaf_fill_jit(n, False, best)


def leaf_forward(x: jax.Array, best, *, force_pallas: bool = False) -> jax.Array:
    """Equivalent of Leaf.forward(x): `best` repeated x.shape[0] times."""
    n = x.shape[0]
    if n == 0:
        return jnp.zeros((0,), dtype=jnp.float32)
    exact = (n % _LANES == 0)       # exact-layout path: no padding, no slice
    big = (4 * n >= _PALLAS_MIN_BYTES)
    if force_pallas or (big and exact):
        return _leaf_forward_pallas(n, best)
    # Constant broadcast: XLA's fused jnp.full is a single exact-size HBM
    # write with no custom-call dispatch, padding or trailing slice copy.
    return jnp.full((n,), jnp.asarray(best, dtype=jnp.float32))


# ----------------------------------------------------------------------------
# Plain-JAX glue: Leaf.populate_best (mode of the labels). Training-time, not
# the forward hot path, so it stays in JAX. O(M log M) via sort + run-length
# counts; ties resolve to the smallest modal value.
# NOTE: exact float equality is fine for integer class ids; fragile for true
# floating-point labels.
# ----------------------------------------------------------------------------
def populate_best(y: jax.Array) -> jax.Array:
    if y.shape[0] == 0:
        return jnp.asarray(0.0, dtype=jnp.float32)
    vals = jnp.sort(y.astype(jnp.float32))                  # (M,)
    left = jnp.searchsorted(vals, vals, side="left")        # run starts
    right = jnp.searchsorted(vals, vals, side="right")      # run ends
    counts = right - left                                   # run lengths
    return vals[jnp.argmax(counts)]                         # first max -> smallest mode


class LeafPallas:
    """JAX/Pallas mirror of the PyTorch Leaf module."""

    def __init__(self):
        self.best = None

    def populate_best(self, x, y):
        self.best = populate_best(y)
        return self.best

    def forward(self, x):
        return leaf_forward(x, self.best)

    __call__ = forward

    def loss(self, x, y, loss_val):  # passthrough, matches the PyTorch module
        return loss_val


if __name__ == "__main__":
    key = jax.random.PRNGKey(0)
    kx, ky, kx2 = jax.random.split(key, 3)

    # Small shapes consistent with the module: x is [num_inputs, num_features].
    num_inputs, num_features = 256, 16
    x = jax.random.normal(kx, (num_inputs, num_features), dtype=jnp.float32)
    y = jax.random.randint(ky, (num_inputs,), 0, 4, dtype=jnp.int32)

    leaf = LeafPallas()
    best = leaf.populate_best(x, y)

    # Run the Pallas kernel once at the small shape (forced; the default
    # dispatch would use the fused jnp.full path below the size threshold).
    out_small = jax.block_until_ready(leaf_forward(x, best, force_pallas=True))
    ref_small = jnp.full((num_inputs,), best, dtype=jnp.float32)
    assert out_small.shape == (num_inputs,), out_small.shape
    assert out_small.dtype == jnp.float32, out_small.dtype
    assert bool(jnp.all(out_small == ref_small)), (out_small, ref_small)

    # Ragged batch (not a multiple of 128): forced Pallas pad+slice path.
    n_ragged = 300
    x_ragged = jax.random.normal(kx2, (n_ragged, num_features), dtype=jnp.float32)
    out_ragged = jax.block_until_ready(leaf_forward(x_ragged, best, force_pallas=True))
    assert out_ragged.shape == (n_ragged,), out_ragged.shape
    assert bool(jnp.all(out_ragged == best)), "ragged-batch mismatch"

    # Large batch: default dispatch takes the Pallas path (multi-block grid,
    # 4/8 MiB contiguous full-width blocks, no trailing slice).
    n_big = 2 * 1024 * 1024
    x_big = jnp.ones((n_big, 1), dtype=jnp.float32)
    out_big = jax.block_until_ready(leaf(x_big))
    assert out_big.shape == (n_big,), out_big.shape
    assert out_big.dtype == jnp.float32, out_big.dtype
    assert bool(jnp.all(out_big == best)), "large-batch mismatch"

    print("KERNEL_OK")
</pallas_src>

<mosaic_0001>
module attributes {stable_mosaic.version = 11 : i64} {
  func.func @_leaf_fill_kernel(%arg0: i32, %arg1: memref<1xf32, #tpu.memory_space<smem>>, %arg2: memref<1x256xf32, #tpu.memory_space<vmem>>) attributes {dimension_semantics = [#tpu.dimension_semantics<parallel>], iteration_bounds = array<i64: 1>, scalar_prefetch = 0 : i64, scratch_operands = 0 : i64, tpu.core_type = #tpu.core_type<tc>, window_params = [{transform_indices = @transform_0, window_bounds = array<i64: 1>}, {transform_indices = @transform_1, window_bounds = array<i64: 1, 256>}]} {
    %c0 = arith.constant 0 : index
    %0 = memref.load %arg1[%c0] : memref<1xf32, #tpu.memory_space<smem>>
    %1 = vector.broadcast %0 : f32 to vector<1x256xf32>
    %c0_0 = arith.constant 0 : index
    %c0_1 = arith.constant 0 : index
    %2 = vector.load %arg2[%c0_0, %c0_1] : memref<1x256xf32, #tpu.memory_space<vmem>>, vector<1x256xf32>
    tpu.vector_store %arg2[%c0_0, %c0_1], %1 {strides = array<i32>} : memref<1x256xf32, #tpu.memory_space<vmem>>, vector<1x256xf32>,
    return
  }
  func.func @transform_0(%arg0: i32) -> i32 {
    %c0_i32 = arith.constant 0 : i32
    %c0_i32_0 = arith.constant 0 : i32
    return %c0_i32 : i32
  }
  func.func @transform_1(%arg0: i32) -> (i32, i32) {
    %c0_i32 = arith.constant 0 : i32
    %c0_i32_0 = arith.constant 0 : i32
    return %arg0, %c0_i32 : i32, i32
  }
}

</mosaic_0001>

<llo_original>
// kernel: _leaf_fill_jit.1
$region0: #{_leaf_fill_jit.1}
  #allocation0 [shape = 'u32[]', space=smem, size = 0x4, offset = 0x4, fixed_abs, tag = 'smem constant byte address 0x4 - core index']
  #allocation1 [shape = 'u32[144,128]{1,0:T(1,128)}', space=vmem, size = 0x12000, scoped, tag = 'internal scratch']
  #allocation2 [shape = 'f32[1]{0:T(128)S(6)}', space=smem, size = 0x200, scoped, tag = 'scoped memory for _leaf_fill_jit.1']
  %s0 = inlined_call_operand.<no memory space> [shape: f32[1], index: 0, kind: input, shape index: {}]
  %s1 = inlined_call_operand.hbm [shape: f32[1,256], index: 1, kind: output, shape index: {}]
  %s2 = sld [smem:[#allocation0]]
  $region14: #{_leaf_fill_jit.1} parent=0
    _
  %s4 = ssub.s32 1, %s2
  %s5 = scalar_select 0, %s4, %s2
  %6 = sst [smem:[#allocation2]] %s0
  $region1: #{_leaf_fill_jit.1} parent=0
    #allocation3 [shape = 'u8[1024]{0}', space=vmem, size = 0x400, scoped, tag = 'output window, operand 0, single buffered']
    #allocation4 [shape = 's32[1]{0}', space=sflag, size = 0x4, scoped, tag = 'scoped memory for _leaf_fill_jit.1']
    %7 = vsyncpa [#allocation4], 0
    // Predicated region
    $region2: #{_leaf_fill_jit.1} parent=1 // pred_check
      _
    $region3: #{_leaf_fill_jit.1} parent=1 // pred_check_branch
      %9 = sbr.rel (0) target = $region5
    $region4: #{_leaf_fill_jit.1} parent=1 // pred_region
      _
    $region5: #{_leaf_fill_jit.1} parent=1 // pred_fallthru
      _
    %s10 = sld [smem:[#allocation2]]
    %v11 = vstv %s10
    %v12 = vlaneseq
    %vm13 = vcmp.ge.s32.totalorder %v12, 0
    %vm14 = vcmp.lt.s32.totalorder %v12, 256
    %vm15 = vmand %vm13, %vm14
    %16 = vst.msk [vmem:[#allocation3] sm:$0x3] %vm15, %v11
    // Predicated region
    $region6: #{_leaf_fill_jit.1} parent=1 // pred_check
      _
    $region7: #{_leaf_fill_jit.1} parent=1 // pred_check_branch
      %18 = sbr.rel (0) target = $region9
    $region8: #{_leaf_fill_jit.1} parent=1 // pred_region
      %s20 = ssub.s32 32, 32
      %21 = vsyncadd [#allocation4], %s20
      %s23 = sshll.u32 [#allocation3], 4
      %s24 = int_to_ptr.vmem [resolvable:$true] %s23
      %26 = dma.vmem_to_hbm [thread:$0]  %s24, 32, %s1, [#allocation4]
    $region9: #{_leaf_fill_jit.1} parent=1 // pred_fallthru
      _
    // Predicated region
    $region10: #{_leaf_fill_jit.1} parent=1 // pred_check
      _
    $region11: #{_leaf_fill_jit.1} parent=1 // pred_check_branch
      %28 = sbr.rel (0) target = $region13
    $region12: #{_leaf_fill_jit.1} parent=1 // pred_region
      %29 = dma.done [#allocation4], 32
    $region13: #{_leaf_fill_jit.1} parent=1 // pred_fallthru
      _
    %30 = vsyncpa [#allocation4], 1

</llo_original>
